<compile_context>
chip_gen: v7x
topology: tpu7x:2x2x1
jax: 0.10.0
libtpu: 0.0.40
codegen_flags: <defaults>
</compile_context>

<pallas_src>
import functools
import numpy as np

import jax
import jax.numpy as jnp
from jax.experimental import pallas as pl
from jax.experimental.pallas import tpu as pltpu


# -----------------------------------------------------------------------------
# SINDy library bookkeeping (static Python)
# -----------------------------------------------------------------------------
def _nonlinear_pairs(poly_order, latent_dim):
    """Index tuples of the SINDy library columns of degree >= 2, in library order."""
    pairs = []
    if poly_order > 1:
        for i in range(latent_dim):
            for j in range(i, latent_dim):
                pairs.append((i, j))
    if poly_order > 2:
        for i in range(latent_dim):
            for j in range(i, latent_dim):
                for k in range(j, latent_dim):
                    pairs.append((i, j, k))
    if poly_order > 3:
        for i in range(latent_dim):
            for j in range(i, latent_dim):
                for k in range(j, latent_dim):
                    for p in range(k, latent_dim):
                        pairs.append((i, j, k, p))
    return pairs


def library_size(latent_dim, poly_order):
    size = latent_dim                       # the latent_dim "ones" columns
    if poly_order > 0:
        size += latent_dim                  # linear columns
    size += len(_nonlinear_pairs(poly_order, latent_dim))
    return size


# -----------------------------------------------------------------------------
# Fused kernel (grid=(1,), full-array blocks: everything fits in VMEM easily)
# -----------------------------------------------------------------------------
def _spec(shape):
    nd = len(shape)
    return pl.BlockSpec(shape, lambda i, _nd=nd: (0,) * _nd)


def _net_fused_kernel(x_ref, dx_ref,
                      ew1_ref, eb1_ref, ew2_ref, eb2_ref,
                      dw1_ref, db1_ref, dw2_ref, db2_ref,
                      Ew_ref, Eb_ref,
                      out_ref, theta_ref,
                      *, poly_order, latent_dim, input_dim, nl_pairs):
    f32 = jnp.float32
    x = x_ref[...]
    dx = dx_ref[...]

    # ---------------- encoder: Linear -> Sigmoid -> Linear ----------------
    w1 = ew1_ref[...]                       # (in, hid)
    w2 = ew2_ref[...]                       # (hid, lat)
    a1 = jnp.dot(x, w1, preferred_element_type=f32) + eb1_ref[...]
    h = 1.0 / (1.0 + jnp.exp(-a1))
    z = jnp.dot(h, w2, preferred_element_type=f32) + eb2_ref[...]          # (N, lat)

    # Batch-mean Jacobian of the encoder:  Jbar^T = (W1 * s_row) @ W2,
    # s = mean_n sigma'(a1_n)  kept as a (1, hid) row (lane broadcast).
    s_enc = jnp.mean(h * (1.0 - h), axis=0, keepdims=True)                 # (1, hid)
    m_enc = jnp.dot(w1 * s_enc, w2, preferred_element_type=f32)            # (in, lat)
    dz = jnp.dot(dx, m_enc, preferred_element_type=f32)                    # (N, lat)

    # ---------------- SINDy library + E (theta @ Ew + Eb) ----------------
    Ew = Ew_ref[...]                        # (sindy_dim, lat)
    # latent_dim "ones" columns fold into an effective bias.
    dzb = Eb_ref[...] + jnp.sum(Ew[:latent_dim, :], axis=0, keepdims=True)  # (1, lat)
    if poly_order > 0:
        dzb = dzb + jnp.dot(z, Ew[latent_dim:2 * latent_dim, :],
                            preferred_element_type=f32)                    # (N, lat)
    if len(nl_pairs) > 0:
        for c, idxs in enumerate(nl_pairs):
            col = z[:, idxs[0]:idxs[0] + 1]
            for i in idxs[1:]:
                col = col * z[:, i:i + 1]
            theta_ref[:, c:c + 1] = col
        dzb = dzb + jnp.dot(theta_ref[...], Ew[2 * latent_dim:, :],
                            preferred_element_type=f32)
    if dzb.shape[0] != z.shape[0]:          # only possible for poly_order == 0
        dzb = jnp.broadcast_to(dzb, (z.shape[0], latent_dim))

    # ---------------- decoder: Linear -> Sigmoid -> Linear ----------------
    v1 = dw1_ref[...]                       # (lat, hid)
    v2 = dw2_ref[...]                       # (hid, in)
    a2 = jnp.dot(z, v1, preferred_element_type=f32) + db1_ref[...]
    hd = 1.0 / (1.0 + jnp.exp(-a2))
    xb = jnp.dot(hd, v2, preferred_element_type=f32) + db2_ref[...]        # (N, in)

    s_dec = jnp.mean(hd * (1.0 - hd), axis=0, keepdims=True)               # (1, hid)
    m_dec = jnp.dot(v1 * s_dec, v2, preferred_element_type=f32)            # (lat, in)
    dxb = jnp.dot(dzb, m_dec, preferred_element_type=f32)                  # (N, in)

    # --------- single packed lane-contiguous output: [z | dz | dzb | xb | dxb] ---------
    off = 0
    out_ref[:, off:off + latent_dim] = z;   off += latent_dim
    out_ref[:, off:off + latent_dim] = dz;  off += latent_dim
    out_ref[:, off:off + latent_dim] = dzb; off += latent_dim
    out_ref[:, off:off + input_dim] = xb;   off += input_dim
    out_ref[:, off:off + input_dim] = dxb


def net_forward(params, x, dx, ddx, *, poly_order, latent_dim, model_order=1):
    # TODO(synk): model_order == 2 path (calc_ddz / second-order mean Jacobians) not ported.
    assert model_order == 1
    n, input_dim = x.shape
    nl_pairs = tuple(_nonlinear_pairs(poly_order, latent_dim))
    n_nl = max(len(nl_pairs), 1)
    out_w = 3 * latent_dim + 2 * input_dim

    kern = functools.partial(_net_fused_kernel, poly_order=poly_order,
                             latent_dim=latent_dim, input_dim=input_dim,
                             nl_pairs=nl_pairs)
    args = (x, dx,
            params['enc_w1'], params['enc_b1'], params['enc_w2'], params['enc_b2'],
            params['dec_w1'], params['dec_b1'], params['dec_w2'], params['dec_b2'],
            params['e_w'], params['e_b'])

    packed = pl.pallas_call(
        kern,
        grid=(1,),
        in_specs=[_spec(a.shape) for a in args],
        out_specs=_spec((n, out_w)),
        out_shape=jax.ShapeDtypeStruct((n, out_w), jnp.float32),
        scratch_shapes=[pltpu.VMEM((n, n_nl), jnp.float32)],
        compiler_params=pltpu.CompilerParams(dimension_semantics=("arbitrary",)),
    )(*args)

    z = packed[:, 0:latent_dim]
    dz = packed[:, latent_dim:2 * latent_dim]
    dzb = packed[:, 2 * latent_dim:3 * latent_dim]
    xb = packed[:, 3 * latent_dim:3 * latent_dim + input_dim]
    dxb = packed[:, 3 * latent_dim + input_dim:]
    return z, dz, dzb, xb, dxb


# -----------------------------------------------------------------------------
# Parameters (mirrors Net.__init__ init scheme for len(widths) == 3)
# -----------------------------------------------------------------------------
def init_params(key, widths, sindy_dim, latent_dim):
    assert len(widths) == 3
    gain = 1.0  # nn.init.calculate_gain('sigmoid')
    ks = jax.random.split(key, 9)

    def xavier(k, fan_in, fan_out):
        bound = gain * np.sqrt(6.0 / (fan_in + fan_out))
        return jax.random.uniform(k, (fan_in, fan_out), jnp.float32, -bound, bound)

    def bias(k, fan_in, fan_out):
        bound = 1.0 / np.sqrt(fan_in)
        return jax.random.uniform(k, (1, fan_out), jnp.float32, -bound, bound)

    d0, d1, d2 = widths
    return dict(
        enc_w1=xavier(ks[0], d0, d1), enc_b1=bias(ks[1], d0, d1),
        enc_w2=xavier(ks[2], d1, d2), enc_b2=bias(ks[3], d1, d2),
        dec_w1=xavier(ks[4], d2, d1), dec_b1=bias(ks[5], d2, d1),
        dec_w2=xavier(ks[6], d1, d0), dec_b2=bias(ks[7], d1, d0),
        e_w=jnp.ones((sindy_dim, latent_dim), jnp.float32),   # nn.init.ones_(E.weight)
        e_b=jax.random.uniform(ks[8], (1, latent_dim), jnp.float32,
                               -1.0 / np.sqrt(sindy_dim), 1.0 / np.sqrt(sindy_dim)),
    )


# -----------------------------------------------------------------------------
# Pure-JAX reference (mirrors PyTorch semantics, incl. autograd mean Jacobians)
# -----------------------------------------------------------------------------
def ref_forward(params, x, dx, poly_order, latent_dim):
    W1, b1, W2, b2 = (params['enc_w1'], params['enc_b1'][0],
                      params['enc_w2'], params['enc_b2'][0])
    V1, c1, V2, c2 = (params['dec_w1'], params['dec_b1'][0],
                      params['dec_w2'], params['dec_b2'][0])

    def enc(xi):
        return jax.nn.sigmoid(xi @ W1 + b1) @ W2 + b2

    def dec(zi):
        return jax.nn.sigmoid(zi @ V1 + c1) @ V2 + c2

    z = enc(x)
    gx_enc = jnp.mean(jax.vmap(jax.jacobian(enc))(x), axis=0)   # (latent, input)
    dz = dx @ gx_enc.T

    n = x.shape[0]
    cols = [jnp.ones((n,), jnp.float32) for _ in range(latent_dim)]
    if poly_order > 0:
        for i in range(latent_dim):
            cols.append(z[:, i])
    if poly_order > 1:
        for i in range(latent_dim):
            for j in range(i, latent_dim):
                cols.append(z[:, i] * z[:, j])
    if poly_order > 2:
        for i in range(latent_dim):
            for j in range(i, latent_dim):
                for k in range(j, latent_dim):
                    cols.append(z[:, i] * z[:, j] * z[:, k])
    if poly_order > 3:
        for i in range(latent_dim):
            for j in range(i, latent_dim):
                for k in range(j, latent_dim):
                    for p in range(k, latent_dim):
                        cols.append(z[:, i] * z[:, j] * z[:, k] * z[:, p])
    theta = jnp.stack(cols, axis=1)
    dzb = theta @ params['e_w'] + params['e_b'][0]

    xb = dec(z)
    gx_dec = jnp.mean(jax.vmap(jax.jacobian(dec))(z), axis=0)   # (input, latent)
    dxb = dzb @ gx_dec.T
    return z, dz, dzb, xb, dxb


# -----------------------------------------------------------------------------
if __name__ == "__main__":
    N = 8
    input_dim, hidden, latent_dim = 16, 32, 4
    widths = [input_dim, hidden, latent_dim]
    poly_order = 2
    model_order = 1
    sindy_dim = library_size(latent_dim, poly_order)   # 18

    key = jax.random.PRNGKey(0)
    kp, kx, kdx, kddx = jax.random.split(key, 4)
    params = init_params(kp, widths, sindy_dim, latent_dim)

    x = jax.random.normal(kx, (N, input_dim), jnp.float32)
    dx = jax.random.normal(kdx, (N, input_dim), jnp.float32)
    ddx = jax.random.normal(kddx, (N, input_dim), jnp.float32)

    outs = net_forward(params, x, dx, ddx, poly_order=poly_order,
                       latent_dim=latent_dim, model_order=model_order)
    outs = jax.block_until_ready(outs)

    refs = ref_forward(params, x, dx, poly_order, latent_dim)
    for got, want in zip(outs, refs):
        np.testing.assert_allclose(np.asarray(got), np.asarray(want),
                                   rtol=1e-4, atol=1e-4)

    print("KERNEL_OK")
</pallas_src>

<mosaic_0001>
module attributes {stable_mosaic.version = 11 : i64} {
  func.func @_net_fused_kernel(%arg0: i32, %arg1: memref<8x16xf32, #tpu.memory_space<vmem>>, %arg2: memref<8x16xf32, #tpu.memory_space<vmem>>, %arg3: memref<16x32xf32, #tpu.memory_space<vmem>>, %arg4: memref<1x32xf32, #tpu.memory_space<vmem>>, %arg5: memref<32x4xf32, #tpu.memory_space<vmem>>, %arg6: memref<1x4xf32, #tpu.memory_space<vmem>>, %arg7: memref<4x32xf32, #tpu.memory_space<vmem>>, %arg8: memref<1x32xf32, #tpu.memory_space<vmem>>, %arg9: memref<32x16xf32, #tpu.memory_space<vmem>>, %arg10: memref<1x16xf32, #tpu.memory_space<vmem>>, %arg11: memref<18x4xf32, #tpu.memory_space<vmem>>, %arg12: memref<1x4xf32, #tpu.memory_space<vmem>>, %arg13: memref<8x44xf32, #tpu.memory_space<vmem>>, %arg14: memref<8x10xf32, #tpu.memory_space<vmem>>) attributes {dimension_semantics = [#tpu.dimension_semantics<arbitrary>], iteration_bounds = array<i64: 1>, scalar_prefetch = 0 : i64, scratch_operands = 1 : i64, tpu.core_type = #tpu.core_type<tc>, window_params = [{pipeline_mode = #tpu.pipeline_mode<synchronous>, transform_indices = @transform_0, window_bounds = array<i64: 8, 16>}, {pipeline_mode = #tpu.pipeline_mode<synchronous>, transform_indices = @transform_1, window_bounds = array<i64: 8, 16>}, {pipeline_mode = #tpu.pipeline_mode<synchronous>, transform_indices = @transform_2, window_bounds = array<i64: 16, 32>}, {pipeline_mode = #tpu.pipeline_mode<synchronous>, transform_indices = @transform_3, window_bounds = array<i64: 1, 32>}, {pipeline_mode = #tpu.pipeline_mode<synchronous>, transform_indices = @transform_4, window_bounds = array<i64: 32, 4>}, {pipeline_mode = #tpu.pipeline_mode<synchronous>, transform_indices = @transform_5, window_bounds = array<i64: 1, 4>}, {pipeline_mode = #tpu.pipeline_mode<synchronous>, transform_indices = @transform_6, window_bounds = array<i64: 4, 32>}, {pipeline_mode = #tpu.pipeline_mode<synchronous>, transform_indices = @transform_7, window_bounds = array<i64: 1, 32>}, {pipeline_mode = #tpu.pipeline_mode<synchronous>, transform_indices = @transform_8, window_bounds = array<i64: 32, 16>}, {pipeline_mode = #tpu.pipeline_mode<synchronous>, transform_indices = @transform_9, window_bounds = array<i64: 1, 16>}, {pipeline_mode = #tpu.pipeline_mode<synchronous>, transform_indices = @transform_10, window_bounds = array<i64: 18, 4>}, {pipeline_mode = #tpu.pipeline_mode<synchronous>, transform_indices = @transform_11, window_bounds = array<i64: 1, 4>}, {pipeline_mode = #tpu.pipeline_mode<synchronous>, transform_indices = @transform_12, window_bounds = array<i64: 8, 44>}]} {
    %c0 = arith.constant 0 : index
    %c0_0 = arith.constant 0 : index
    %0 = vector.load %arg1[%c0, %c0_0] : memref<8x16xf32, #tpu.memory_space<vmem>>, vector<8x16xf32>
    %c0_1 = arith.constant 0 : index
    %c0_2 = arith.constant 0 : index
    %1 = vector.load %arg2[%c0_1, %c0_2] : memref<8x16xf32, #tpu.memory_space<vmem>>, vector<8x16xf32>
    %c0_3 = arith.constant 0 : index
    %c0_4 = arith.constant 0 : index
    %2 = vector.load %arg3[%c0_3, %c0_4] : memref<16x32xf32, #tpu.memory_space<vmem>>, vector<16x32xf32>
    %c0_5 = arith.constant 0 : index
    %c0_6 = arith.constant 0 : index
    %3 = vector.load %arg5[%c0_5, %c0_6] : memref<32x4xf32, #tpu.memory_space<vmem>>, vector<32x4xf32>
    %cst = arith.constant dense<0.000000e+00> : vector<8x32xf32>
    %4 = tpu.matmul %0, %2, %cst {dimension_numbers = #tpu.dot_dimension_numbers<[1], [0], [0], [1], [0, 0, 1, 1], [], []>} : vector<8x16xf32>, vector<16x32xf32>, vector<8x32xf32> -> vector<8x32xf32>
    %c0_7 = arith.constant 0 : index
    %c0_8 = arith.constant 0 : index
    %5 = vector.load %arg4[%c0_7, %c0_8] : memref<1x32xf32, #tpu.memory_space<vmem>>, vector<1x32xf32>
    %6 = vector.broadcast %5 : vector<1x32xf32> to vector<8x32xf32>
    %7 = arith.addf %4, %6 : vector<8x32xf32>
    %cst_9 = arith.constant 0.000000e+00 : f32
    %8 = vector.broadcast %cst_9 : f32 to vector<8x32xf32>
    %9 = arith.subf %8, %7 : vector<8x32xf32>
    %10 = math.exp %9 : vector<8x32xf32>
    %cst_10 = arith.constant 1.000000e+00 : f32
    %11 = vector.broadcast %cst_10 : f32 to vector<8x32xf32>
    %12 = arith.addf %11, %10 : vector<8x32xf32>
    %cst_11 = arith.constant 1.000000e+00 : f32
    %13 = vector.broadcast %cst_11 : f32 to vector<8x32xf32>
    %14 = arith.divf %13, %12 : vector<8x32xf32>
    %cst_12 = arith.constant dense<0.000000e+00> : vector<8x4xf32>
    %15 = tpu.matmul %14, %3, %cst_12 {dimension_numbers = #tpu.dot_dimension_numbers<[1], [0], [0], [1], [0, 0, 1, 1], [], []>} : vector<8x32xf32>, vector<32x4xf32>, vector<8x4xf32> -> vector<8x4xf32>
    %c0_13 = arith.constant 0 : index
    %c0_14 = arith.constant 0 : index
    %16 = vector.load %arg6[%c0_13, %c0_14] : memref<1x4xf32, #tpu.memory_space<vmem>>, vector<1x4xf32>
    %17 = vector.broadcast %16 : vector<1x4xf32> to vector<8x4xf32>
    %18 = arith.addf %15, %17 : vector<8x4xf32>
    %cst_15 = arith.constant 1.000000e+00 : f32
    %19 = vector.broadcast %cst_15 : f32 to vector<8x32xf32>
    %20 = arith.subf %19, %14 : vector<8x32xf32>
    %21 = arith.mulf %14, %20 : vector<8x32xf32>
    %cst_16 = arith.constant dense<0.000000e+00> : vector<32xf32>
    %22 = vector.multi_reduction <add>, %21, %cst_16 [0] : vector<8x32xf32> to vector<32xf32>
    %23 = vector.shape_cast %22 : vector<32xf32> to vector<1x32xf32>
    %cst_17 = arith.constant 8.000000e+00 : f32
    %24 = vector.broadcast %cst_17 : f32 to vector<1x32xf32>
    %25 = arith.divf %23, %24 : vector<1x32xf32>
    %26 = vector.broadcast %25 : vector<1x32xf32> to vector<16x32xf32>
    %27 = arith.mulf %2, %26 : vector<16x32xf32>
    %cst_18 = arith.constant dense<0.000000e+00> : vector<16x4xf32>
    %28 = tpu.matmul %27, %3, %cst_18 {dimension_numbers = #tpu.dot_dimension_numbers<[1], [0], [0], [1], [0, 0, 1, 1], [], []>} : vector<16x32xf32>, vector<32x4xf32>, vector<16x4xf32> -> vector<16x4xf32>
    %cst_19 = arith.constant dense<0.000000e+00> : vector<8x4xf32>
    %29 = tpu.matmul %1, %28, %cst_19 {dimension_numbers = #tpu.dot_dimension_numbers<[1], [0], [0], [1], [0, 0, 1, 1], [], []>} : vector<8x16xf32>, vector<16x4xf32>, vector<8x4xf32> -> vector<8x4xf32>
    %c0_20 = arith.constant 0 : index
    %c0_21 = arith.constant 0 : index
    %30 = vector.load %arg11[%c0_20, %c0_21] : memref<18x4xf32, #tpu.memory_space<vmem>>, vector<18x4xf32>
    %c0_22 = arith.constant 0 : index
    %c0_23 = arith.constant 0 : index
    %31 = vector.load %arg12[%c0_22, %c0_23] : memref<1x4xf32, #tpu.memory_space<vmem>>, vector<1x4xf32>
    %32 = vector.extract_strided_slice %30 {offsets = [0, 0], sizes = [4, 4], strides = [1, 1]} : vector<18x4xf32> to vector<4x4xf32>
    %cst_24 = arith.constant dense<0.000000e+00> : vector<4xf32>
    %33 = vector.multi_reduction <add>, %32, %cst_24 [0] : vector<4x4xf32> to vector<4xf32>
    %34 = vector.shape_cast %33 : vector<4xf32> to vector<1x4xf32>
    %35 = arith.addf %31, %34 : vector<1x4xf32>
    %36 = vector.extract_strided_slice %30 {offsets = [4, 0], sizes = [4, 4], strides = [1, 1]} : vector<18x4xf32> to vector<4x4xf32>
    %cst_25 = arith.constant dense<0.000000e+00> : vector<8x4xf32>
    %37 = tpu.matmul %18, %36, %cst_25 {dimension_numbers = #tpu.dot_dimension_numbers<[1], [0], [0], [1], [0, 0, 1, 1], [], []>} : vector<8x4xf32>, vector<4x4xf32>, vector<8x4xf32> -> vector<8x4xf32>
    %38 = vector.broadcast %35 : vector<1x4xf32> to vector<8x4xf32>
    %39 = arith.addf %38, %37 : vector<8x4xf32>
    %40 = vector.extract_strided_slice %18 {offsets = [0, 0], sizes = [8, 1], strides = [1, 1]} : vector<8x4xf32> to vector<8x1xf32>
    %41 = vector.extract_strided_slice %18 {offsets = [0, 0], sizes = [8, 1], strides = [1, 1]} : vector<8x4xf32> to vector<8x1xf32>
    %42 = arith.mulf %40, %41 : vector<8x1xf32>
    %c0_26 = arith.constant 0 : index
    %c0_27 = arith.constant 0 : index
    %43 = vector.load %arg14[%c0_26, %c0_27] : memref<8x10xf32, #tpu.memory_space<vmem>>, vector<8x1xf32>
    tpu.vector_store %arg14[%c0_26, %c0_27], %42 {strides = array<i32>} : memref<8x10xf32, #tpu.memory_space<vmem>>, vector<8x1xf32>,
    %44 = vector.extract_strided_slice %18 {offsets = [0, 0], sizes = [8, 1], strides = [1, 1]} : vector<8x4xf32> to vector<8x1xf32>
    %45 = vector.extract_strided_slice %18 {offsets = [0, 1], sizes = [8, 1], strides = [1, 1]} : vector<8x4xf32> to vector<8x1xf32>
    %46 = arith.mulf %44, %45 : vector<8x1xf32>
    %c0_28 = arith.constant 0 : index
    %c1 = arith.constant 1 : index
    %47 = vector.load %arg14[%c0_28, %c1] : memref<8x10xf32, #tpu.memory_space<vmem>>, vector<8x1xf32>
    tpu.vector_store %arg14[%c0_28, %c1], %46 {strides = array<i32>} : memref<8x10xf32, #tpu.memory_space<vmem>>, vector<8x1xf32>,
    %48 = vector.extract_strided_slice %18 {offsets = [0, 0], sizes = [8, 1], strides = [1, 1]} : vector<8x4xf32> to vector<8x1xf32>
    %49 = vector.extract_strided_slice %18 {offsets = [0, 2], sizes = [8, 1], strides = [1, 1]} : vector<8x4xf32> to vector<8x1xf32>
    %50 = arith.mulf %48, %49 : vector<8x1xf32>
    %c0_29 = arith.constant 0 : index
    %c2 = arith.constant 2 : index
    %51 = vector.load %arg14[%c0_29, %c2] : memref<8x10xf32, #tpu.memory_space<vmem>>, vector<8x1xf32>
    tpu.vector_store %arg14[%c0_29, %c2], %50 {strides = array<i32>} : memref<8x10xf32, #tpu.memory_space<vmem>>, vector<8x1xf32>,
    %52 = vector.extract_strided_slice %18 {offsets = [0, 0], sizes = [8, 1], strides = [1, 1]} : vector<8x4xf32> to vector<8x1xf32>
    %53 = vector.extract_strided_slice %18 {offsets = [0, 3], sizes = [8, 1], strides = [1, 1]} : vector<8x4xf32> to vector<8x1xf32>
    %54 = arith.mulf %52, %53 : vector<8x1xf32>
    %c0_30 = arith.constant 0 : index
    %c3 = arith.constant 3 : index
    %55 = vector.load %arg14[%c0_30, %c3] : memref<8x10xf32, #tpu.memory_space<vmem>>, vector<8x1xf32>
    tpu.vector_store %arg14[%c0_30, %c3], %54 {strides = array<i32>} : memref<8x10xf32, #tpu.memory_space<vmem>>, vector<8x1xf32>,
    %56 = vector.extract_strided_slice %18 {offsets = [0, 1], sizes = [8, 1], strides = [1, 1]} : vector<8x4xf32> to vector<8x1xf32>
    %57 = vector.extract_strided_slice %18 {offsets = [0, 1], sizes = [8, 1], strides = [1, 1]} : vector<8x4xf32> to vector<8x1xf32>
    %58 = arith.mulf %56, %57 : vector<8x1xf32>
    %c0_31 = arith.constant 0 : index
    %c4 = arith.constant 4 : index
    %59 = vector.load %arg14[%c0_31, %c4] : memref<8x10xf32, #tpu.memory_space<vmem>>, vector<8x1xf32>
    tpu.vector_store %arg14[%c0_31, %c4], %58 {strides = array<i32>} : memref<8x10xf32, #tpu.memory_space<vmem>>, vector<8x1xf32>,
    %60 = vector.extract_strided_slice %18 {offsets = [0, 1], sizes = [8, 1], strides = [1, 1]} : vector<8x4xf32> to vector<8x1xf32>
    %61 = vector.extract_strided_slice %18 {offsets = [0, 2], sizes = [8, 1], strides = [1, 1]} : vector<8x4xf32> to vector<8x1xf32>
    %62 = arith.mulf %60, %61 : vector<8x1xf32>
    %c0_32 = arith.constant 0 : index
    %c5 = arith.constant 5 : index
    %63 = vector.load %arg14[%c0_32, %c5] : memref<8x10xf32, #tpu.memory_space<vmem>>, vector<8x1xf32>
    tpu.vector_store %arg14[%c0_32, %c5], %62 {strides = array<i32>} : memref<8x10xf32, #tpu.memory_space<vmem>>, vector<8x1xf32>,
    %64 = vector.extract_strided_slice %18 {offsets = [0, 1], sizes = [8, 1], strides = [1, 1]} : vector<8x4xf32> to vector<8x1xf32>
    %65 = vector.extract_strided_slice %18 {offsets = [0, 3], sizes = [8, 1], strides = [1, 1]} : vector<8x4xf32> to vector<8x1xf32>
    %66 = arith.mulf %64, %65 : vector<8x1xf32>
    %c0_33 = arith.constant 0 : index
    %c6 = arith.constant 6 : index
    %67 = vector.load %arg14[%c0_33, %c6] : memref<8x10xf32, #tpu.memory_space<vmem>>, vector<8x1xf32>
    tpu.vector_store %arg14[%c0_33, %c6], %66 {strides = array<i32>} : memref<8x10xf32, #tpu.memory_space<vmem>>, vector<8x1xf32>,
    %68 = vector.extract_strided_slice %18 {offsets = [0, 2], sizes = [8, 1], strides = [1, 1]} : vector<8x4xf32> to vector<8x1xf32>
    %69 = vector.extract_strided_slice %18 {offsets = [0, 2], sizes = [8, 1], strides = [1, 1]} : vector<8x4xf32> to vector<8x1xf32>
    %70 = arith.mulf %68, %69 : vector<8x1xf32>
    %c0_34 = arith.constant 0 : index
    %c7 = arith.constant 7 : index
    %71 = vector.load %arg14[%c0_34, %c7] : memref<8x10xf32, #tpu.memory_space<vmem>>, vector<8x1xf32>
    tpu.vector_store %arg14[%c0_34, %c7], %70 {strides = array<i32>} : memref<8x10xf32, #tpu.memory_space<vmem>>, vector<8x1xf32>,
    %72 = vector.extract_strided_slice %18 {offsets = [0, 2], sizes = [8, 1], strides = [1, 1]} : vector<8x4xf32> to vector<8x1xf32>
    %73 = vector.extract_strided_slice %18 {offsets = [0, 3], sizes = [8, 1], strides = [1, 1]} : vector<8x4xf32> to vector<8x1xf32>
    %74 = arith.mulf %72, %73 : vector<8x1xf32>
    %c0_35 = arith.constant 0 : index
    %c8 = arith.constant 8 : index
    %75 = vector.load %arg14[%c0_35, %c8] : memref<8x10xf32, #tpu.memory_space<vmem>>, vector<8x1xf32>
    tpu.vector_store %arg14[%c0_35, %c8], %74 {strides = array<i32>} : memref<8x10xf32, #tpu.memory_space<vmem>>, vector<8x1xf32>,
    %76 = vector.extract_strided_slice %18 {offsets = [0, 3], sizes = [8, 1], strides = [1, 1]} : vector<8x4xf32> to vector<8x1xf32>
    %77 = vector.extract_strided_slice %18 {offsets = [0, 3], sizes = [8, 1], strides = [1, 1]} : vector<8x4xf32> to vector<8x1xf32>
    %78 = arith.mulf %76, %77 : vector<8x1xf32>
    %c0_36 = arith.constant 0 : index
    %c9 = arith.constant 9 : index
    %79 = vector.load %arg14[%c0_36, %c9] : memref<8x10xf32, #tpu.memory_space<vmem>>, vector<8x1xf32>
    tpu.vector_store %arg14[%c0_36, %c9], %78 {strides = array<i32>} : memref<8x10xf32, #tpu.memory_space<vmem>>, vector<8x1xf32>,
    %c0_37 = arith.constant 0 : index
    %c0_38 = arith.constant 0 : index
    %80 = vector.load %arg14[%c0_37, %c0_38] : memref<8x10xf32, #tpu.memory_space<vmem>>, vector<8x10xf32>
    %81 = vector.extract_strided_slice %30 {offsets = [8, 0], sizes = [10, 4], strides = [1, 1]} : vector<18x4xf32> to vector<10x4xf32>
    %cst_39 = arith.constant dense<0.000000e+00> : vector<8x4xf32>
    %82 = tpu.matmul %80, %81, %cst_39 {dimension_numbers = #tpu.dot_dimension_numbers<[1], [0], [0], [1], [0, 0, 1, 1], [], []>} : vector<8x10xf32>, vector<10x4xf32>, vector<8x4xf32> -> vector<8x4xf32>
    %83 = arith.addf %39, %82 : vector<8x4xf32>
    %c0_40 = arith.constant 0 : index
    %c0_41 = arith.constant 0 : index
    %84 = vector.load %arg7[%c0_40, %c0_41] : memref<4x32xf32, #tpu.memory_space<vmem>>, vector<4x32xf32>
    %c0_42 = arith.constant 0 : index
    %c0_43 = arith.constant 0 : index
    %85 = vector.load %arg9[%c0_42, %c0_43] : memref<32x16xf32, #tpu.memory_space<vmem>>, vector<32x16xf32>
    %cst_44 = arith.constant dense<0.000000e+00> : vector<8x32xf32>
    %86 = tpu.matmul %18, %84, %cst_44 {dimension_numbers = #tpu.dot_dimension_numbers<[1], [0], [0], [1], [0, 0, 1, 1], [], []>} : vector<8x4xf32>, vector<4x32xf32>, vector<8x32xf32> -> vector<8x32xf32>
    %c0_45 = arith.constant 0 : index
    %c0_46 = arith.constant 0 : index
    %87 = vector.load %arg8[%c0_45, %c0_46] : memref<1x32xf32, #tpu.memory_space<vmem>>, vector<1x32xf32>
    %88 = vector.broadcast %87 : vector<1x32xf32> to vector<8x32xf32>
    %89 = arith.addf %86, %88 : vector<8x32xf32>
    %cst_47 = arith.constant 0.000000e+00 : f32
    %90 = vector.broadcast %cst_47 : f32 to vector<8x32xf32>
    %91 = arith.subf %90, %89 : vector<8x32xf32>
    %92 = math.exp %91 : vector<8x32xf32>
    %cst_48 = arith.constant 1.000000e+00 : f32
    %93 = vector.broadcast %cst_48 : f32 to vector<8x32xf32>
    %94 = arith.addf %93, %92 : vector<8x32xf32>
    %cst_49 = arith.constant 1.000000e+00 : f32
    %95 = vector.broadcast %cst_49 : f32 to vector<8x32xf32>
    %96 = arith.divf %95, %94 : vector<8x32xf32>
    %cst_50 = arith.constant dense<0.000000e+00> : vector<8x16xf32>
    %97 = tpu.matmul %96, %85, %cst_50 {dimension_numbers = #tpu.dot_dimension_numbers<[1], [0], [0], [1], [0, 0, 1, 1], [], []>} : vector<8x32xf32>, vector<32x16xf32>, vector<8x16xf32> -> vector<8x16xf32>
    %c0_51 = arith.constant 0 : index
    %c0_52 = arith.constant 0 : index
    %98 = vector.load %arg10[%c0_51, %c0_52] : memref<1x16xf32, #tpu.memory_space<vmem>>, vector<1x16xf32>
    %99 = vector.broadcast %98 : vector<1x16xf32> to vector<8x16xf32>
    %100 = arith.addf %97, %99 : vector<8x16xf32>
    %cst_53 = arith.constant 1.000000e+00 : f32
    %101 = vector.broadcast %cst_53 : f32 to vector<8x32xf32>
    %102 = arith.subf %101, %96 : vector<8x32xf32>
    %103 = arith.mulf %96, %102 : vector<8x32xf32>
    %cst_54 = arith.constant dense<0.000000e+00> : vector<32xf32>
    %104 = vector.multi_reduction <add>, %103, %cst_54 [0] : vector<8x32xf32> to vector<32xf32>
    %105 = vector.shape_cast %104 : vector<32xf32> to vector<1x32xf32>
    %cst_55 = arith.constant 8.000000e+00 : f32
    %106 = vector.broadcast %cst_55 : f32 to vector<1x32xf32>
    %107 = arith.divf %105, %106 : vector<1x32xf32>
    %108 = vector.broadcast %107 : vector<1x32xf32> to vector<4x32xf32>
    %109 = arith.mulf %84, %108 : vector<4x32xf32>
    %cst_56 = arith.constant dense<0.000000e+00> : vector<4x16xf32>
    %110 = tpu.matmul %109, %85, %cst_56 {dimension_numbers = #tpu.dot_dimension_numbers<[1], [0], [0], [1], [0, 0, 1, 1], [], []>} : vector<4x32xf32>, vector<32x16xf32>, vector<4x16xf32> -> vector<4x16xf32>
    %cst_57 = arith.constant dense<0.000000e+00> : vector<8x16xf32>
    %111 = tpu.matmul %83, %110, %cst_57 {dimension_numbers = #tpu.dot_dimension_numbers<[1], [0], [0], [1], [0, 0, 1, 1], [], []>} : vector<8x4xf32>, vector<4x16xf32>, vector<8x16xf32> -> vector<8x16xf32>
    %c0_58 = arith.constant 0 : index
    %c0_59 = arith.constant 0 : index
    %112 = vector.load %arg13[%c0_58, %c0_59] : memref<8x44xf32, #tpu.memory_space<vmem>>, vector<8x4xf32>
    tpu.vector_store %arg13[%c0_58, %c0_59], %18 {strides = array<i32>} : memref<8x44xf32, #tpu.memory_space<vmem>>, vector<8x4xf32>,
    %c0_60 = arith.constant 0 : index
    %c4_61 = arith.constant 4 : index
    %113 = vector.load %arg13[%c0_60, %c4_61] : memref<8x44xf32, #tpu.memory_space<vmem>>, vector<8x4xf32>
    tpu.vector_store %arg13[%c0_60, %c4_61], %29 {strides = array<i32>} : memref<8x44xf32, #tpu.memory_space<vmem>>, vector<8x4xf32>,
    %c0_62 = arith.constant 0 : index
    %c8_63 = arith.constant 8 : index
    %114 = vector.load %arg13[%c0_62, %c8_63] : memref<8x44xf32, #tpu.memory_space<vmem>>, vector<8x4xf32>
    tpu.vector_store %arg13[%c0_62, %c8_63], %83 {strides = array<i32>} : memref<8x44xf32, #tpu.memory_space<vmem>>, vector<8x4xf32>,
    %c0_64 = arith.constant 0 : index
    %c12 = arith.constant 12 : index
    %115 = vector.load %arg13[%c0_64, %c12] : memref<8x44xf32, #tpu.memory_space<vmem>>, vector<8x16xf32>
    tpu.vector_store %arg13[%c0_64, %c12], %100 {strides = array<i32>} : memref<8x44xf32, #tpu.memory_space<vmem>>, vector<8x16xf32>,
    %c0_65 = arith.constant 0 : index
    %c28 = arith.constant 28 : index
    %116 = vector.load %arg13[%c0_65, %c28] : memref<8x44xf32, #tpu.memory_space<vmem>>, vector<8x16xf32>
    tpu.vector_store %arg13[%c0_65, %c28], %111 {strides = array<i32>} : memref<8x44xf32, #tpu.memory_space<vmem>>, vector<8x16xf32>,
    return
  }
  func.func @transform_0(%arg0: i32) -> (i32, i32) {
    %c0_i32 = arith.constant 0 : i32
    %c0_i32_0 = arith.constant 0 : i32
    %c0_i32_1 = arith.constant 0 : i32
    return %c0_i32, %c0_i32_0 : i32, i32
  }
  func.func @transform_1(%arg0: i32) -> (i32, i32) {
    %c0_i32 = arith.constant 0 : i32
    %c0_i32_0 = arith.constant 0 : i32
    %c0_i32_1 = arith.constant 0 : i32
    return %c0_i32, %c0_i32_0 : i32, i32
  }
  func.func @transform_2(%arg0: i32) -> (i32, i32) {
    %c0_i32 = arith.constant 0 : i32
    %c0_i32_0 = arith.constant 0 : i32
    %c0_i32_1 = arith.constant 0 : i32
    return %c0_i32, %c0_i32_0 : i32, i32
  }
  func.func @transform_3(%arg0: i32) -> (i32, i32) {
    %c0_i32 = arith.constant 0 : i32
    %c0_i32_0 = arith.constant 0 : i32
    %c0_i32_1 = arith.constant 0 : i32
    return %c0_i32, %c0_i32_0 : i32, i32
  }
  func.func @transform_4(%arg0: i32) -> (i32, i32) {
    %c0_i32 = arith.constant 0 : i32
    %c0_i32_0 = arith.constant 0 : i32
    %c0_i32_1 = arith.constant 0 : i32
    return %c0_i32, %c0_i32_0 : i32, i32
  }
  func.func @transform_5(%arg0: i32) -> (i32, i32) {
    %c0_i32 = arith.constant 0 : i32
    %c0_i32_0 = arith.constant 0 : i32
    %c0_i32_1 = arith.constant 0 : i32
    return %c0_i32, %c0_i32_0 : i32, i32
  }
  func.func @transform_6(%arg0: i32) -> (i32, i32) {
    %c0_i32 = arith.constant 0 : i32
    %c0_i32_0 = arith.constant 0 : i32
    %c0_i32_1 = arith.constant 0 : i32
    return %c0_i32, %c0_i32_0 : i32, i32
  }
  func.func @transform_7(%arg0: i32) -> (i32, i32) {
    %c0_i32 = arith.constant 0 : i32
    %c0_i32_0 = arith.constant 0 : i32
    %c0_i32_1 = arith.constant 0 : i32
    return %c0_i32, %c0_i32_0 : i32, i32
  }
  func.func @transform_8(%arg0: i32) -> (i32, i32) {
    %c0_i32 = arith.constant 0 : i32
    %c0_i32_0 = arith.constant 0 : i32
    %c0_i32_1 = arith.constant 0 : i32
    return %c0_i32, %c0_i32_0 : i32, i32
  }
  func.func @transform_9(%arg0: i32) -> (i32, i32) {
    %c0_i32 = arith.constant 0 : i32
    %c0_i32_0 = arith.constant 0 : i32
    %c0_i32_1 = arith.constant 0 : i32
    return %c0_i32, %c0_i32_0 : i32, i32
  }
  func.func @transform_10(%arg0: i32) -> (i32, i32) {
    %c0_i32 = arith.constant 0 : i32
    %c0_i32_0 = arith.constant 0 : i32
    %c0_i32_1 = arith.constant 0 : i32
    return %c0_i32, %c0_i32_0 : i32, i32
  }
  func.func @transform_11(%arg0: i32) -> (i32, i32) {
    %c0_i32 = arith.constant 0 : i32
    %c0_i32_0 = arith.constant 0 : i32
    %c0_i32_1 = arith.constant 0 : i32
    return %c0_i32, %c0_i32_0 : i32, i32
  }
  func.func @transform_12(%arg0: i32) -> (i32, i32) {
    %c0_i32 = arith.constant 0 : i32
    %c0_i32_0 = arith.constant 0 : i32
    %c0_i32_1 = arith.constant 0 : i32
    return %c0_i32, %c0_i32_0 : i32, i32
  }
}

</mosaic_0001>

<llo_original>
// kernel: tpu_custom_call.1
$region0: #{tpu_custom_call.1}
  #allocation0 [shape = 'u32[]', space=smem, size = 0x4, offset = 0x4, fixed_abs, tag = 'smem constant byte address 0x4 - core index']
  #allocation1 [shape = 'u32[144,128]{1,0:T(1,128)}', space=vmem, size = 0x12000, scoped, tag = 'internal scratch']
  #allocation2 [shape = 'f32[8,10]{1,0:T(8,128)}', space=vmem, size = 0x1000, scoped, tag = 'scratch operand']
  %s0 = inlined_call_operand.vmem [shape: f32[8,16], index: 0, kind: input, shape index: {}]
  %s1 = inlined_call_operand.vmem [shape: f32[8,16], index: 1, kind: input, shape index: {}]
  %s2 = inlined_call_operand.vmem [shape: f32[16,32], index: 2, kind: input, shape index: {}]
  %s3 = inlined_call_operand.vmem [shape: f32[1,32], index: 3, kind: input, shape index: {}]
  %s4 = inlined_call_operand.vmem [shape: f32[32,4], index: 4, kind: input, shape index: {}]
  %s5 = inlined_call_operand.vmem [shape: f32[1,4], index: 5, kind: input, shape index: {}]
  %s6 = inlined_call_operand.vmem [shape: f32[4,32], index: 6, kind: input, shape index: {}]
  %s7 = inlined_call_operand.vmem [shape: f32[1,32], index: 7, kind: input, shape index: {}]
  %s8 = inlined_call_operand.vmem [shape: f32[32,16], index: 8, kind: input, shape index: {}]
  %s9 = inlined_call_operand.vmem [shape: f32[1,16], index: 9, kind: input, shape index: {}]
  %s10 = inlined_call_operand.vmem [shape: f32[18,4], index: 10, kind: input, shape index: {}]
  %s11 = inlined_call_operand.vmem [shape: f32[1,4], index: 11, kind: input, shape index: {}]
  %s12 = inlined_call_operand.hbm [shape: f32[8,44], index: 12, kind: output, shape index: {}]
  %s13 = sld [smem:[#allocation0]]
  $region58: #{tpu_custom_call.1} parent=0
    _
  %s15 = ssub.s32 1, %s13
  %s16 = scalar_select 0, %s15, %s13
  $region1: #{tpu_custom_call.1} parent=0
    #allocation3 [shape = 'u8[4096]{0}', space=vmem, size = 0x1000, scoped, tag = 'output window, operand 0, single buffered']
    #allocation4 [shape = 's32[1]{0}', space=sflag, size = 0x4, scoped, tag = 'scoped memory for tpu_custom_call.1']
    %17 = vsyncpa [#allocation4], 0
    // Predicated region
    $region2: #{tpu_custom_call.1} parent=1 // pred_check
      _
    $region3: #{tpu_custom_call.1} parent=1 // pred_check_branch
      %19 = sbr.rel (0) target = $region5
    $region4: #{tpu_custom_call.1} parent=1 // pred_region
      _
    $region5: #{tpu_custom_call.1} parent=1 // pred_fallthru
      _
    // Predicated region
    $region6: #{tpu_custom_call.1} parent=1 // pred_check
      _
    $region7: #{tpu_custom_call.1} parent=1 // pred_check_branch
      %21 = sbr.rel (0) target = $region9
    $region8: #{tpu_custom_call.1} parent=1 // pred_region
      _
    $region9: #{tpu_custom_call.1} parent=1 // pred_fallthru
      _
    // Predicated region
    $region10: #{tpu_custom_call.1} parent=1 // pred_check
      _
    $region11: #{tpu_custom_call.1} parent=1 // pred_check_branch
      %23 = sbr.rel (0) target = $region13
    $region12: #{tpu_custom_call.1} parent=1 // pred_region
      _
    $region13: #{tpu_custom_call.1} parent=1 // pred_fallthru
      _
    // Predicated region
    $region14: #{tpu_custom_call.1} parent=1 // pred_check
      _
    $region15: #{tpu_custom_call.1} parent=1 // pred_check_branch
      %25 = sbr.rel (0) target = $region17
    $region16: #{tpu_custom_call.1} parent=1 // pred_region
      _
    $region17: #{tpu_custom_call.1} parent=1 // pred_fallthru
      _
    // Predicated region
    $region18: #{tpu_custom_call.1} parent=1 // pred_check
      _
    $region19: #{tpu_custom_call.1} parent=1 // pred_check_branch
      %27 = sbr.rel (0) target = $region21
    $region20: #{tpu_custom_call.1} parent=1 // pred_region
      _
    $region21: #{tpu_custom_call.1} parent=1 // pred_fallthru
      _
    // Predicated region
    $region22: #{tpu_custom_call.1} parent=1 // pred_check
      _
    $region23: #{tpu_custom_call.1} parent=1 // pred_check_branch
      %29 = sbr.rel (0) target = $region25
    $region24: #{tpu_custom_call.1} parent=1 // pred_region
      _
    $region25: #{tpu_custom_call.1} parent=1 // pred_fallthru
      _
    // Predicated region
    $region26: #{tpu_custom_call.1} parent=1 // pred_check
      _
    $region27: #{tpu_custom_call.1} parent=1 // pred_check_branch
      %31 = sbr.rel (0) target = $region29
    $region28: #{tpu_custom_call.1} parent=1 // pred_region
      _
    $region29: #{tpu_custom_call.1} parent=1 // pred_fallthru
      _
    // Predicated region
    $region30: #{tpu_custom_call.1} parent=1 // pred_check
      _
    $region31: #{tpu_custom_call.1} parent=1 // pred_check_branch
      %33 = sbr.rel (0) target = $region33
    $region32: #{tpu_custom_call.1} parent=1 // pred_region
      _
    $region33: #{tpu_custom_call.1} parent=1 // pred_fallthru
      _
    // Predicated region
    $region34: #{tpu_custom_call.1} parent=1 // pred_check
      _
    $region35: #{tpu_custom_call.1} parent=1 // pred_check_branch
      %35 = sbr.rel (0) target = $region37
    $region36: #{tpu_custom_call.1} parent=1 // pred_region
      _
    $region37: #{tpu_custom_call.1} parent=1 // pred_fallthru
      _
    // Predicated region
    $region38: #{tpu_custom_call.1} parent=1 // pred_check
      _
    $region39: #{tpu_custom_call.1} parent=1 // pred_check_branch
      %37 = sbr.rel (0) target = $region41
    $region40: #{tpu_custom_call.1} parent=1 // pred_region
      _
    $region41: #{tpu_custom_call.1} parent=1 // pred_fallthru
      _
    // Predicated region
    $region42: #{tpu_custom_call.1} parent=1 // pred_check
      _
    $region43: #{tpu_custom_call.1} parent=1 // pred_check_branch
      %39 = sbr.rel (0) target = $region45
    $region44: #{tpu_custom_call.1} parent=1 // pred_region
      _
    $region45: #{tpu_custom_call.1} parent=1 // pred_fallthru
      _
    // Predicated region
    $region46: #{tpu_custom_call.1} parent=1 // pred_check
      _
    $region47: #{tpu_custom_call.1} parent=1 // pred_check_branch
      %41 = sbr.rel (0) target = $region49
    $region48: #{tpu_custom_call.1} parent=1 // pred_region
      _
    $region49: #{tpu_custom_call.1} parent=1 // pred_fallthru
      _
    %v42 = vld [vmem:[%s0] sm:$0xff]
    %v43 = vld [vmem:[%s1] sm:$0xff]
    %v44 = vld [vmem:[%s2] sm:$0xff]
    %v45 = vld [vmem:[%s2 + $0x8] sm:$0xff]
    %v46 = vld [vmem:[%s4] sm:$0xff]
    %v47 = vld [vmem:[%s4 + $0x8] sm:$0xff]
    %v48 = vld [vmem:[%s4 + $0x10] sm:$0xff]
    %v49 = vld [vmem:[%s4 + $0x18] sm:$0xff]
    %v50 = vld [vmem:[%s3] sm:$0x1]
    %v52 = vlaneseq
    %v53 = vshrl.u32 %v52, 7
    %v54 = vsub.s32 0, %v53
    %v55 = vrot.slane %v50, %v54
    %vm57 = vcmask 130048
    %v59 = vsel %vm57, %v42, 0
    %61 = vmatprep.subr.mxu0 0.0
    %62 = vmatpush1.msra.mxu0 %v44
    %63 = vmatprep.subr.mxu0 0.0
    %64 = vmatpush1.msra.mxu0 %v45
    %65 = vmatprep.subr.mxu0 0.0
    %66 = vmatpush1.msra.mxu0 0.0
    %67 = vmatprep.subr.mxu0 0.0
    %68 = vmatpush1.msra.mxu0 0.0
    %69 = vmatprep.subr.mxu0 0.0
    %70 = vmatpush1.msra.mxu0 0.0
    %71 = vmatprep.subr.mxu0 0.0
    %72 = vmatpush1.msra.mxu0 0.0
    %73 = vmatprep.subr.mxu0 0.0
    %74 = vmatpush1.msra.mxu0 0.0
    %75 = vmatprep.subr.mxu0 0.0
    %76 = vmatpush1.msra.mxu0 0.0
    %77 = vmatprep.subr.mxu0 0.0
    %78 = vmatpush1.msra.mxu0 0.0
    %79 = vmatprep.subr.mxu0 0.0
    %80 = vmatpush1.msra.mxu0 0.0
    %81 = vmatprep.subr.mxu0 0.0
    %82 = vmatpush1.msra.mxu0 0.0
    %83 = vmatprep.subr.mxu0 0.0
    %84 = vmatpush1.msra.mxu0 0.0
    %85 = vmatprep.subr.mxu0 0.0
    %86 = vmatpush1.msra.mxu0 0.0
    %87 = vmatprep.subr.mxu0 0.0
    %88 = vmatpush1.msra.mxu0 0.0
    %89 = vmatprep.subr.mxu0 0.0
    %90 = vmatpush1.msra.mxu0 0.0
    %91 = vmatprep.subr.mxu0 0.0
    %92 = vmatpush1.msra.mxu0 0.0
    %93 = vmatprep.subr.mxu0 0.0
    %94 = vmatpush1.msra.mxu0 0.0
    %95 = vmatprep.subr.mxu0 0.0
    %96 = vmatpush1.msra.mxu0 0.0
    %97 = vmatprep.subr.mxu0 0.0
    %98 = vmatpush1.msra.mxu0 0.0
    %99 = vmatprep.subr.mxu0 0.0
    %100 = vmatpush1.msra.mxu0 0.0
    %101 = vmatprep.subr.mxu0 0.0
    %102 = vmatpush1.msra.mxu0 0.0
    %103 = vmatprep.subr.mxu0 0.0
    %104 = vmatpush1.msra.mxu0 0.0
    %105 = vmatprep.subr.mxu0 0.0
    %106 = vmatpush1.msra.mxu0 0.0
    %107 = vmatprep.subr.mxu0 0.0
    %108 = vmatpush1.msra.mxu0 0.0
    %109 = vmatprep.subr.mxu0 0.0
    %110 = vmatpush1.msra.mxu0 0.0
    %111 = vmatprep.subr.mxu0 0.0
    %112 = vmatpush1.msra.mxu0 0.0
    %113 = vmatprep.subr.mxu0 0.0
    %114 = vmatpush1.msra.mxu0 0.0
    %115 = vmatprep.subr.mxu0 0.0
    %116 = vmatpush1.msra.mxu0 0.0
    %117 = vmatprep.subr.mxu0 0.0
    %118 = vmatpush1.msra.mxu0 0.0
    %119 = vmatprep.subr.mxu0 0.0
    %120 = vmatpush1.msra.mxu0 0.0
    %121 = vmatprep.subr.mxu0 0.0
    %122 = vmatpush1.msra.mxu0 0.0
    %123 = vmatprep.subr.mxu0 0.0
    %124 = vmatpush1.msra.mxu0 0.0
    %125 = vmatprep.mubr.f32.mxu0 0.0
    %126 = vmatmul.mubr.f32.gmra.mrb[0].mxu0 %v59
    %v127 = vpop.f32.mrb[0].mxu0
    %v128 = vadd.f32 %v55, %v127
    %v129 = vpop.f32.mrb[0].mxu0
    %130 = vdwg.mxu0
    %v131 = vsub.f32 0.0, %v128
    %v132 = vmul.f32 %v131, 1.442695
    %v133 = vpow.pop %v132
    %v134 = vadd.f32 %v133, 1.0
    %v135 = vrcp.pop %v134
    %v136 = vmul.f32 1.0, %v135
    %v137 = vld [vmem:[%s5] sm:$0x1]
    %v139 = vlaneseq
    %v140 = vshrl.u32 %v139, 7
    %v141 = vsub.s32 0, %v140
    %v142 = vrot.slane %v137, %v141
    %vm144 = vcmask 261120
    %v146 = vsel %vm144, %v136, 0
    %148 = vmatprep.subr.mxu0 0.0
    %149 = vmatpush1.msra.mxu0 %v46
    %150 = vmatprep.subr.mxu0 0.0
    %151 = vmatpush1.msra.mxu0 %v47
    %152 = vmatprep.subr.mxu0 0.0
    %153 = vmatpush1.msra.mxu0 %v48
    %154 = vmatprep.subr.mxu0 0.0
    %155 = vmatpush1.msra.mxu0 %v49
    %156 = vmatprep.subr.mxu0 0.0
    %157 = vmatpush1.msra.mxu0 0.0
    %158 = vmatprep.subr.mxu0 0.0
    %159 = vmatpush1.msra.mxu0 0.0
    %160 = vmatprep.subr.mxu0 0.0
    %161 = vmatpush1.msra.mxu0 0.0
    %162 = vmatprep.subr.mxu0 0.0
    %163 = vmatpush1.msra.mxu0 0.0
    %164 = vmatprep.subr.mxu0 0.0
    %165 = vmatpush1.msra.mxu0 0.0
    %166 = vmatprep.subr.mxu0 0.0
    %167 = vmatpush1.msra.mxu0 0.0
    %168 = vmatprep.subr.mxu0 0.0
    %169 = vmatpush1.msra.mxu0 0.0
    %170 = vmatprep.subr.mxu0 0.0
    %171 = vmatpush1.msra.mxu0 0.0
    %172 = vmatprep.subr.mxu0 0.0
    %173 = vmatpush1.msra.mxu0 0.0
    %174 = vmatprep.subr.mxu0 0.0
    %175 = vmatpush1.msra.mxu0 0.0
    %176 = vmatprep.subr.mxu0 0.0
    %177 = vmatpush1.msra.mxu0 0.0
    %178 = vmatprep.subr.mxu0 0.0
    %179 = vmatpush1.msra.mxu0 0.0
    %180 = vmatprep.subr.mxu0 0.0
    %181 = vmatpush1.msra.mxu0 0.0
    %182 = vmatprep.subr.mxu0 0.0
    %183 = vmatpush1.msra.mxu0 0.0
    %184 = vmatprep.subr.mxu0 0.0
    %185 = vmatpush1.msra.mxu0 0.0
    %186 = vmatprep.subr.mxu0 0.0
    %187 = vmatpush1.msra.mxu0 0.0
    %188 = vmatprep.subr.mxu0 0.0
    %189 = vmatpush1.msra.mxu0 0.0
    %190 = vmatprep.subr.mxu0 0.0
    %191 = vmatpush1.msra.mxu0 0.0
    %192 = vmatprep.subr.mxu0 0.0
    %193 = vmatpush1.msra.mxu0 0.0
    %194 = vmatprep.subr.mxu0 0.0
    %195 = vmatpush1.msra.mxu0 0.0
    %196 = vmatprep.subr.mxu0 0.0
    %197 = vmatpush1.msra.mxu0 0.0
    %198 = vmatprep.subr.mxu0 0.0
    %199 = vmatpush1.msra.mxu0 0.0
    %200 = vmatprep.subr.mxu0 0.0
    %201 = vmatpush1.msra.mxu0 0.0
    %202 = vmatprep.subr.mxu0 0.0
    %203 = vmatpush1.msra.mxu0 0.0
    %204 = vmatprep.subr.mxu0 0.0
    %205 = vmatpush1.msra.mxu0 0.0
    %206 = vmatprep.subr.mxu0 0.0
    %207 = vmatpush1.msra.mxu0 0.0
    %208 = vmatprep.subr.mxu0 0.0
    %209 = vmatpush1.msra.mxu0 0.0
    %210 = vmatprep.subr.mxu0 0.0
    %211 = vmatpush1.msra.mxu0 0.0
    %212 = vmatprep.mubr.f32.mxu0 0.0
    %213 = vmatmul.mubr.f32.gmra.mrb[0].mxu0 %v146
    %v214 = vpop.f32.mrb[0].mxu0
    %v215 = vadd.f32 %v142, %v214
    %v216 = vpop.f32.mrb[0].mxu0
    %217 = vdwg.mxu0
    %v218 = vsub.f32 1.0, %v136
    %v219 = vmul.f32 %v136, %v218
    %v220 = vsel %vm144, %v219, 0.0
    %v221 = vrot.slane %v220, 4
    %v222 = vadd.f32 %v220, %v221
    %v223 = vrot.slane %v222, 2
    %v224 = vadd.f32 %v222, %v223
    %v225 = vrot.slane %v224, 1
    %v226 = vadd.f32 %v224, %v225
    %v227 = vrcp.pop 8.0
    %v228 = vmul.f32 %v226, %v227
    %v229 = vmul.f32 %v44, %v228
    %v230 = vmul.f32 %v45, %v228
    %v232 = vsel %vm144, %v229, 0
    %v235 = vsel %vm144, %v230, 0
    %237 = vmatprep.subr.mxu0 0.0
    %238 = vmatpush1.msra.mxu0 %v46
    %239 = vmatprep.subr.mxu0 0.0
    %240 = vmatpush1.msra.mxu0 %v47
    %241 = vmatprep.subr.mxu0 0.0
    %242 = vmatpush1.msra.mxu0 %v48
    %243 = vmatprep.subr.mxu0 0.0
    %244 = vmatpush1.msra.mxu0 %v49
    %245 = vmatprep.subr.mxu0 0.0
    %246 = vmatpush1.msra.mxu0 0.0
    %247 = vmatprep.subr.mxu0 0.0
    %248 = vmatpush1.msra.mxu0 0.0
    %249 = vmatprep.subr.mxu0 0.0
    %250 = vmatpush1.msra.mxu0 0.0
    %251 = vmatprep.subr.mxu0 0.0
    %252 = vmatpush1.msra.mxu0 0.0
    %253 = vmatprep.subr.mxu0 0.0
    %254 = vmatpush1.msra.mxu0 0.0
    %255 = vmatprep.subr.mxu0 0.0
    %256 = vmatpush1.msra.mxu0 0.0
    %257 = vmatprep.subr.mxu0 0.0
    %258 = vmatpush1.msra.mxu0 0.0
    %259 = vmatprep.subr.mxu0 0.0
    %260 = vmatpush1.msra.mxu0 0.0
    %261 = vmatprep.subr.mxu0 0.0
    %262 = vmatpush1.msra.mxu0 0.0
    %263 = vmatprep.subr.mxu0 0.0
    %264 = vmatpush1.msra.mxu0 0.0
    %265 = vmatprep.subr.mxu0 0.0
    %266 = vmatpush1.msra.mxu0 0.0
    %267 = vmatprep.subr.mxu0 0.0
    %268 = vmatpush1.msra.mxu0 0.0
    %269 = vmatprep.subr.mxu0 0.0
    %270 = vmatpush1.msra.mxu0 0.0
    %271 = vmatprep.subr.mxu0 0.0
    %272 = vmatpush1.msra.mxu0 0.0
    %273 = vmatprep.subr.mxu0 0.0
    %274 = vmatpush1.msra.mxu0 0.0
    %275 = vmatprep.subr.mxu0 0.0
    %276 = vmatpush1.msra.mxu0 0.0
    %277 = vmatprep.subr.mxu0 0.0
    %278 = vmatpush1.msra.mxu0 0.0
    %279 = vmatprep.subr.mxu0 0.0
    %280 = vmatpush1.msra.mxu0 0.0
    %281 = vmatprep.subr.mxu0 0.0
    %282 = vmatpush1.msra.mxu0 0.0
    %283 = vmatprep.subr.mxu0 0.0
    %284 = vmatpush1.msra.mxu0 0.0
    %285 = vmatprep.subr.mxu0 0.0
    %286 = vmatpush1.msra.mxu0 0.0
    %287 = vmatprep.subr.mxu0 0.0
    %288 = vmatpush1.msra.mxu0 0.0
    %289 = vmatprep.subr.mxu0 0.0
    %290 = vmatpush1.msra.mxu0 0.0
    %291 = vmatprep.subr.mxu0 0.0
    %292 = vmatpush1.msra.mxu0 0.0
    %293 = vmatprep.subr.mxu0 0.0
    %294 = vmatpush1.msra.mxu0 0.0
    %295 = vmatprep.subr.mxu0 0.0
    %296 = vmatpush1.msra.mxu0 0.0
    %297 = vmatprep.subr.mxu0 0.0
    %298 = vmatpush1.msra.mxu0 0.0
    %299 = vmatprep.subr.mxu0 0.0
    %300 = vmatpush1.msra.mxu0 0.0
    %301 = vmatprep.mubr.f32.mxu0 0.0
    %302 = vmatmul.mubr.f32.gmra.mrb[0].mxu0 %v232
    %v303 = vpop.f32.mrb[0].mxu0
    %v304 = vadd.f32 0.0, %v303
    %v305 = vpop.f32.mrb[0].mxu0
    %306 = vmatprep.mubr.f32.mxu0 0.0
    %307 = vmatmul.mubr.f32.gmra.mrb[0].mxu0 %v235
    %v308 = vpop.f32.mrb[0].mxu0
    %v309 = vadd.f32 0.0, %v308
    %v310 = vpop.f32.mrb[0].mxu0
    %311 = vdwg.mxu0
    %v313 = vsel %vm57, %v43, 0
    %315 = vmatprep.subr.mxu0 0.0
    %316 = vmatpush1.msra.mxu0 %v304
    %317 = vmatprep.subr.mxu0 0.0
    %318 = vmatpush1.msra.mxu0 %v309
    %319 = vmatprep.subr.mxu0 0.0
    %320 = vmatpush1.msra.mxu0 0.0
    %321 = vmatprep.subr.mxu0 0.0
    %322 = vmatpush1.msra.mxu0 0.0
    %323 = vmatprep.subr.mxu0 0.0
    %324 = vmatpush1.msra.mxu0 0.0
    %325 = vmatprep.subr.mxu0 0.0
    %326 = vmatpush1.msra.mxu0 0.0
    %327 = vmatprep.subr.mxu0 0.0
    %328 = vmatpush1.msra.mxu0 0.0
    %329 = vmatprep.subr.mxu0 0.0
    %330 = vmatpush1.msra.mxu0 0.0
    %331 = vmatprep.subr.mxu0 0.0
    %332 = vmatpush1.msra.mxu0 0.0
    %333 = vmatprep.subr.mxu0 0.0
    %334 = vmatpush1.msra.mxu0 0.0
    %335 = vmatprep.subr.mxu0 0.0
    %336 = vmatpush1.msra.mxu0 0.0
    %337 = vmatprep.subr.mxu0 0.0
    %338 = vmatpush1.msra.mxu0 0.0
    %339 = vmatprep.subr.mxu0 0.0
    %340 = vmatpush1.msra.mxu0 0.0
    %341 = vmatprep.subr.mxu0 0.0
    %342 = vmatpush1.msra.mxu0 0.0
    %343 = vmatprep.subr.mxu0 0.0
    %344 = vmatpush1.msra.mxu0 0.0
    %345 = vmatprep.subr.mxu0 0.0
    %346 = vmatpush1.msra.mxu0 0.0
    %347 = vmatprep.subr.mxu0 0.0
    %348 = vmatpush1.msra.mxu0 0.0
    %349 = vmatprep.subr.mxu0 0.0
    %350 = vmatpush1.msra.mxu0 0.0
    %351 = vmatprep.subr.mxu0 0.0
    %352 = vmatpush1.msra.mxu0 0.0
    %353 = vmatprep.subr.mxu0 0.0
    %354 = vmatpush1.msra.mxu0 0.0
    %355 = vmatprep.subr.mxu0 0.0
    %356 = vmatpush1.msra.mxu0 0.0
    %357 = vmatprep.subr.mxu0 0.0
    %358 = vmatpush1.msra.mxu0 0.0
    %359 = vmatprep.subr.mxu0 0.0
    %360 = vmatpush1.msra.mxu0 0.0
    %361 = vmatprep.subr.mxu0 0.0
    %362 = vmatpush1.msra.mxu0 0.0
    %363 = vmatprep.subr.mxu0 0.0
    %364 = vmatpush1.msra.mxu0 0.0
    %365 = vmatprep.subr.mxu0 0.0
    %366 = vmatpush1.msra.mxu0 0.0
    %367 = vmatprep.subr.mxu0 0.0
    %368 = vmatpush1.msra.mxu0 0.0
    %369 = vmatprep.subr.mxu0 0.0
    %370 = vmatpush1.msra.mxu0 0.0
    %371 = vmatprep.subr.mxu0 0.0
    %372 = vmatpush1.msra.mxu0 0.0
    %373 = vmatprep.subr.mxu0 0.0
    %374 = vmatpush1.msra.mxu0 0.0
    %375 = vmatprep.subr.mxu0 0.0
    %376 = vmatpush1.msra.mxu0 0.0
    %377 = vmatprep.subr.mxu0 0.0
    %378 = vmatpush1.msra.mxu0 0.0
    %379 = vmatprep.mubr.f32.mxu0 0.0
    %380 = vmatmul.mubr.f32.gmra.mrb[0].mxu0 %v313
    %v381 = vpop.f32.mrb[0].mxu0
    %v382 = vadd.f32 0.0, %v381
    %v383 = vpop.f32.mrb[0].mxu0
    %384 = vdwg.mxu0
    %v385 = vld [vmem:[%s10] sm:$0xff]
    %v386 = vld [vmem:[%s10 + $0x8] sm:$0xff]
    %v387 = vld [vmem:[%s10 + $0x10] sm:$0x3]
    %v388 = vld [vmem:[%s11] sm:$0x1]
    %vm389 = vcmask 27648
    %v390 = vsel %vm389, %v385, 0.0
    %v391 = vrot.slane %v390, 4
    %v392 = vadd.f32 %v390, %v391
    %v393 = vrot.slane %v392, 2
    %v394 = vadd.f32 %v392, %v393
    %v395 = vrot.slane %v394, 1
    %v396 = vadd.f32 %v394, %v395
    %v397 = vadd.f32 %v388, %v396
    %v399 = vrot.slane %v385, 4
    %vm400 = vcmask 31744
    %v402 = vsel %vm400, %v215, 0
    %vm404 = vcmask 1043456
    %v405 = vsel %vm404, %v399, 0
    %407 = vmatprep.subr.mxu0 0.0
    %408 = vmatpush1.msra.mxu0 %v405
    %409 = vmatprep.subr.mxu0 0.0
    %410 = vmatpush1.msra.mxu0 0.0
    %411 = vmatprep.subr.mxu0 0.0
    %412 = vmatpush1.msra.mxu0 0.0
    %413 = vmatprep.subr.mxu0 0.0
    %414 = vmatpush1.msra.mxu0 0.0
    %415 = vmatprep.subr.mxu0 0.0
    %416 = vmatpush1.msra.mxu0 0.0
    %417 = vmatprep.subr.mxu0 0.0
    %418 = vmatpush1.msra.mxu0 0.0
    %419 = vmatprep.subr.mxu0 0.0
    %420 = vmatpush1.msra.mxu0 0.0
    %421 = vmatprep.subr.mxu0 0.0
    %422 = vmatpush1.msra.mxu0 0.0
    %423 = vmatprep.subr.mxu0 0.0
    %424 = vmatpush1.msra.mxu0 0.0
    %425 = vmatprep.subr.mxu0 0.0
    %426 = vmatpush1.msra.mxu0 0.0
    %427 = vmatprep.subr.mxu0 0.0
    %428 = vmatpush1.msra.mxu0 0.0
    %429 = vmatprep.subr.mxu0 0.0
    %430 = vmatpush1.msra.mxu0 0.0
    %431 = vmatprep.subr.mxu0 0.0
    %432 = vmatpush1.msra.mxu0 0.0
    %433 = vmatprep.subr.mxu0 0.0
    %434 = vmatpush1.msra.mxu0 0.0
    %435 = vmatprep.subr.mxu0 0.0
    %436 = vmatpush1.msra.mxu0 0.0
    %437 = vmatprep.subr.mxu0 0.0
    %438 = vmatpush1.msra.mxu0 0.0
    %439 = vmatprep.subr.mxu0 0.0
    %440 = vmatpush1.msra.mxu0 0.0
    %441 = vmatprep.subr.mxu0 0.0
    %442 = vmatpush1.msra.mxu0 0.0
    %443 = vmatprep.subr.mxu0 0.0
    %444 = vmatpush1.msra.mxu0 0.0
    %445 = vmatprep.subr.mxu0 0.0
    %446 = vmatpush1.msra.mxu0 0.0
    %447 = vmatprep.subr.mxu0 0.0
    %448 = vmatpush1.msra.mxu0 0.0
    %449 = vmatprep.subr.mxu0 0.0
    %450 = vmatpush1.msra.mxu0 0.0
    %451 = vmatprep.subr.mxu0 0.0
    %452 = vmatpush1.msra.mxu0 0.0
    %453 = vmatprep.subr.mxu0 0.0
    %454 = vmatpush1.msra.mxu0 0.0
    %455 = vmatprep.subr.mxu0 0.0
    %456 = vmatpush1.msra.mxu0 0.0
    %457 = vmatprep.subr.mxu0 0.0
    %458 = vmatpush1.msra.mxu0 0.0
    %459 = vmatprep.subr.mxu0 0.0
    %460 = vmatpush1.msra.mxu0 0.0
    %461 = vmatprep.subr.mxu0 0.0
    %462 = vmatpush1.msra.mxu0 0.0
    %463 = vmatprep.subr.mxu0 0.0
    %464 = vmatpush1.msra.mxu0 0.0
    %465 = vmatprep.subr.mxu0 0.0
    %466 = vmatpush1.msra.mxu0 0.0
    %467 = vmatprep.subr.mxu0 0.0
    %468 = vmatpush1.msra.mxu0 0.0
    %469 = vmatprep.subr.mxu0 0.0
    %470 = vmatpush1.msra.mxu0 0.0
    %471 = vmatprep.mubr.f32.mxu0 0.0
    %472 = vmatmul.mubr.f32.gmra.mrb[0].mxu0 %v402
    %v473 = vpop.f32.mrb[0].mxu0
    %v474 = vadd.f32 0.0, %v473
    %v475 = vpop.f32.mrb[0].mxu0
    %476 = vdwg.mxu0
    %v478 = vlaneseq
    %v479 = vshrl.u32 %v478, 7
    %v480 = vsub.s32 0, %v479
    %v481 = vrot.slane %v397, %v480
    %v483 = vadd.f32 %v481, %v474
    %v484 = vmul.f32 %v215, %v215
    %vm485 = vcmask 7168
    %486 = vst.msk [vmem:[#allocation2] sm:$0xff] %vm485, %v484
    %487 = vrot.lane.b32.xlu0 %v215, 127
    %v488 = vpop.permute.xlu0 %487
    %v490 = vmul.f32 %v215, %v488
    %492 = vrot.lane.b32.xlu0 %v490, 1
    %v493 = vpop.permute.xlu0 %492
    %vm495 = vcmask 15368
    %496 = vst.msk [vmem:[#allocation2] sm:$0xff] %vm495, %v493
    %497 = vrot.lane.b32.xlu0 %v215, 126
    %v498 = vpop.permute.xlu0 %497
    %v500 = vmul.f32 %v215, %v498
    %502 = vrot.lane.b32.xlu0 %v500, 2
    %v503 = vpop.permute.xlu0 %502
    %vm505 = vcmask 23568
    %506 = vst.msk [vmem:[#allocation2] sm:$0xff] %vm505, %v503
    %507 = vrot.lane.b32.xlu0 %v215, 125
    %v508 = vpop.permute.xlu0 %507
    %v510 = vmul.f32 %v215, %v508
    %512 = vrot.lane.b32.xlu0 %v510, 3
    %v513 = vpop.permute.xlu0 %512
    %vm515 = vcmask 31768
    %516 = vst.msk [vmem:[#allocation2] sm:$0xff] %vm515, %v513
    %518 = vrot.lane.b32.xlu0 %v484, 3
    %v519 = vpop.permute.xlu0 %518
    %vm521 = vcmask 39968
    %522 = vst.msk [vmem:[#allocation2] sm:$0xff] %vm521, %v519
    %523 = vrot.lane.b32.xlu0 %v490, 4
    %v524 = vpop.permute.xlu0 %523
    %vm526 = vcmask 48168
    %527 = vst.msk [vmem:[#allocation2] sm:$0xff] %vm526, %v524
    %528 = vrot.lane.b32.xlu0 %v500, 5
    %v529 = vpop.permute.xlu0 %528
    %vm531 = vcmask 56368
    %532 = vst.msk [vmem:[#allocation2] sm:$0xff] %vm531, %v529
    %533 = vrot.lane.b32.xlu0 %v484, 5
    %v534 = vpop.permute.xlu0 %533
    %vm536 = vcmask 64568
    %537 = vst.msk [vmem:[#allocation2] sm:$0xff] %vm536, %v534
    %538 = vrot.lane.b32.xlu0 %v490, 6
    %v539 = vpop.permute.xlu0 %538
    %vm541 = vcmask 72768
    %542 = vst.msk [vmem:[#allocation2] sm:$0xff] %vm541, %v539
    %543 = vrot.lane.b32.xlu0 %v484, 6
    %v544 = vpop.permute.xlu0 %543
    %vm546 = vcmask 80968
    %547 = vst.msk [vmem:[#allocation2] sm:$0xff] %vm546, %v544
    %v548 = vld [vmem:[#allocation2] sm:$0xff]
    %vm549 = vcmask 80896
    %v551 = vsel %vm549, %v548, 0
    %vm553 = vcmask 1041408
    %v555 = vsel %vm553, %v387, 0
    %557 = vmatprep.subr.mxu0 0.0
    %558 = vmatpush1.msra.mxu0 %v386
    %559 = vmatprep.subr.mxu0 0.0
    %560 = vmatpush1.msra.mxu0 %v555
    %561 = vmatprep.subr.mxu0 0.0
    %562 = vmatpush1.msra.mxu0 0.0
    %563 = vmatprep.subr.mxu0 0.0
    %564 = vmatpush1.msra.mxu0 0.0
    %565 = vmatprep.subr.mxu0 0.0
    %566 = vmatpush1.msra.mxu0 0.0
    %567 = vmatprep.subr.mxu0 0.0
    %568 = vmatpush1.msra.mxu0 0.0
    %569 = vmatprep.subr.mxu0 0.0
    %570 = vmatpush1.msra.mxu0 0.0
    %571 = vmatprep.subr.mxu0 0.0
    %572 = vmatpush1.msra.mxu0 0.0
    %573 = vmatprep.subr.mxu0 0.0
    %574 = vmatpush1.msra.mxu0 0.0
    %575 = vmatprep.subr.mxu0 0.0
    %576 = vmatpush1.msra.mxu0 0.0
    %577 = vmatprep.subr.mxu0 0.0
    %578 = vmatpush1.msra.mxu0 0.0
    %579 = vmatprep.subr.mxu0 0.0
    %580 = vmatpush1.msra.mxu0 0.0
    %581 = vmatprep.subr.mxu0 0.0
    %582 = vmatpush1.msra.mxu0 0.0
    %583 = vmatprep.subr.mxu0 0.0
    %584 = vmatpush1.msra.mxu0 0.0
    %585 = vmatprep.subr.mxu0 0.0
    %586 = vmatpush1.msra.mxu0 0.0
    %587 = vmatprep.subr.mxu0 0.0
    %588 = vmatpush1.msra.mxu0 0.0
    %589 = vmatprep.subr.mxu0 0.0
    %590 = vmatpush1.msra.mxu0 0.0
    %591 = vmatprep.subr.mxu0 0.0
    %592 = vmatpush1.msra.mxu0 0.0
    %593 = vmatprep.subr.mxu0 0.0
    %594 = vmatpush1.msra.mxu0 0.0
    %595 = vmatprep.subr.mxu0 0.0
    %596 = vmatpush1.msra.mxu0 0.0
    %597 = vmatprep.subr.mxu0 0.0
    %598 = vmatpush1.msra.mxu0 0.0
    %599 = vmatprep.subr.mxu0 0.0
    %600 = vmatpush1.msra.mxu0 0.0
    %601 = vmatprep.subr.mxu0 0.0
    %602 = vmatpush1.msra.mxu0 0.0
    %603 = vmatprep.subr.mxu0 0.0
    %604 = vmatpush1.msra.mxu0 0.0
    %605 = vmatprep.subr.mxu0 0.0
    %606 = vmatpush1.msra.mxu0 0.0
    %607 = vmatprep.subr.mxu0 0.0
    %608 = vmatpush1.msra.mxu0 0.0
    %609 = vmatprep.subr.mxu0 0.0
    %610 = vmatpush1.msra.mxu0 0.0
    %611 = vmatprep.subr.mxu0 0.0
    %612 = vmatpush1.msra.mxu0 0.0
    %613 = vmatprep.subr.mxu0 0.0
    %614 = vmatpush1.msra.mxu0 0.0
    %615 = vmatprep.subr.mxu0 0.0
    %616 = vmatpush1.msra.mxu0 0.0
    %617 = vmatprep.subr.mxu0 0.0
    %618 = vmatpush1.msra.mxu0 0.0
    %619 = vmatprep.subr.mxu0 0.0
    %620 = vmatpush1.msra.mxu0 0.0
    %621 = vmatprep.mubr.f32.mxu0 0.0
    %622 = vmatmul.mubr.f32.gmra.mrb[0].mxu0 %v551
    %v623 = vpop.f32.mrb[0].mxu0
    %v624 = vadd.f32 0.0, %v623
    %v625 = vpop.f32.mrb[0].mxu0
    %626 = vdwg.mxu0
    %v627 = vadd.f32 %v483, %v624
    %v628 = vld [vmem:[%s6] sm:$0xf]
    %v629 = vld [vmem:[%s8] sm:$0xff]
    %v630 = vld [vmem:[%s8 + $0x8] sm:$0xff]
    %v631 = vld [vmem:[%s8 + $0x10] sm:$0xff]
    %v632 = vld [vmem:[%s8 + $0x18] sm:$0xff]
    %v633 = vld [vmem:[%s7] sm:$0x1]
    %v635 = vlaneseq
    %v636 = vshrl.u32 %v635, 7
    %v637 = vsub.s32 0, %v636
    %v638 = vrot.slane %v633, %v637
    %v641 = vsel %vm404, %v628, 0
    %643 = vmatprep.subr.mxu0 0.0
    %644 = vmatpush1.msra.mxu0 %v641
    %645 = vmatprep.subr.mxu0 0.0
    %646 = vmatpush1.msra.mxu0 0.0
    %647 = vmatprep.subr.mxu0 0.0
    %648 = vmatpush1.msra.mxu0 0.0
    %649 = vmatprep.subr.mxu0 0.0
    %650 = vmatpush1.msra.mxu0 0.0
    %651 = vmatprep.subr.mxu0 0.0
    %652 = vmatpush1.msra.mxu0 0.0
    %653 = vmatprep.subr.mxu0 0.0
    %654 = vmatpush1.msra.mxu0 0.0
    %655 = vmatprep.subr.mxu0 0.0
    %656 = vmatpush1.msra.mxu0 0.0
    %657 = vmatprep.subr.mxu0 0.0
    %658 = vmatpush1.msra.mxu0 0.0
    %659 = vmatprep.subr.mxu0 0.0
    %660 = vmatpush1.msra.mxu0 0.0
    %661 = vmatprep.subr.mxu0 0.0
    %662 = vmatpush1.msra.mxu0 0.0
    %663 = vmatprep.subr.mxu0 0.0
    %664 = vmatpush1.msra.mxu0 0.0
    %665 = vmatprep.subr.mxu0 0.0
    %666 = vmatpush1.msra.mxu0 0.0
    %667 = vmatprep.subr.mxu0 0.0
    %668 = vmatpush1.msra.mxu0 0.0
    %669 = vmatprep.subr.mxu0 0.0
    %670 = vmatpush1.msra.mxu0 0.0
    %671 = vmatprep.subr.mxu0 0.0
    %672 = vmatpush1.msra.mxu0 0.0
    %673 = vmatprep.subr.mxu0 0.0
    %674 = vmatpush1.msra.mxu0 0.0
    %675 = vmatprep.subr.mxu0 0.0
    %676 = vmatpush1.msra.mxu0 0.0
    %677 = vmatprep.subr.mxu0 0.0
    %678 = vmatpush1.msra.mxu0 0.0
    %679 = vmatprep.subr.mxu0 0.0
    %680 = vmatpush1.msra.mxu0 0.0
    %681 = vmatprep.subr.mxu0 0.0
    %682 = vmatpush1.msra.mxu0 0.0
    %683 = vmatprep.subr.mxu0 0.0
    %684 = vmatpush1.msra.mxu0 0.0
    %685 = vmatprep.subr.mxu0 0.0
    %686 = vmatpush1.msra.mxu0 0.0
    %687 = vmatprep.subr.mxu0 0.0
    %688 = vmatpush1.msra.mxu0 0.0
    %689 = vmatprep.subr.mxu0 0.0
    %690 = vmatpush1.msra.mxu0 0.0
    %691 = vmatprep.subr.mxu0 0.0
    %692 = vmatpush1.msra.mxu0 0.0
    %693 = vmatprep.subr.mxu0 0.0
    %694 = vmatpush1.msra.mxu0 0.0
    %695 = vmatprep.subr.mxu0 0.0
    %696 = vmatpush1.msra.mxu0 0.0
    %697 = vmatprep.subr.mxu0 0.0
    %698 = vmatpush1.msra.mxu0 0.0
    %699 = vmatprep.subr.mxu0 0.0
    %700 = vmatpush1.msra.mxu0 0.0
    %701 = vmatprep.subr.mxu0 0.0
    %702 = vmatpush1.msra.mxu0 0.0
    %703 = vmatprep.subr.mxu0 0.0
    %704 = vmatpush1.msra.mxu0 0.0
    %705 = vmatprep.subr.mxu0 0.0
    %706 = vmatpush1.msra.mxu0 0.0
    %707 = vmatprep.mubr.f32.mxu0 0.0
    %708 = vmatmul.mubr.f32.gmra.mrb[0].mxu0 %v402
    %v709 = vpop.f32.mrb[0].mxu0
    %v710 = vadd.f32 %v638, %v709
    %v711 = vpop.f32.mrb[0].mxu0
    %712 = vdwg.mxu0
    %v713 = vsub.f32 0.0, %v710
    %v714 = vmul.f32 %v713, 1.442695
    %v715 = vpow.pop %v714
    %v716 = vadd.f32 %v715, 1.0
    %v717 = vrcp.pop %v716
    %v718 = vmul.f32 1.0, %v717
    %v719 = vld [vmem:[%s9] sm:$0x1]
    %v721 = vlaneseq
    %v722 = vshrl.u32 %v721, 7
    %v723 = vsub.s32 0, %v722
    %v724 = vrot.slane %v719, %v723
    %v727 = vsel %vm144, %v718, 0
    %729 = vmatprep.subr.mxu0 0.0
    %730 = vmatpush1.msra.mxu0 %v629
    %731 = vmatprep.subr.mxu0 0.0
    %732 = vmatpush1.msra.mxu0 %v630
    %733 = vmatprep.subr.mxu0 0.0
    %734 = vmatpush1.msra.mxu0 %v631
    %735 = vmatprep.subr.mxu0 0.0
    %736 = vmatpush1.msra.mxu0 %v632
    %737 = vmatprep.subr.mxu0 0.0
    %738 = vmatpush1.msra.mxu0 0.0
    %739 = vmatprep.subr.mxu0 0.0
    %740 = vmatpush1.msra.mxu0 0.0
    %741 = vmatprep.subr.mxu0 0.0
    %742 = vmatpush1.msra.mxu0 0.0
    %743 = vmatprep.subr.mxu0 0.0
    %744 = vmatpush1.msra.mxu0 0.0
    %745 = vmatprep.subr.mxu0 0.0
    %746 = vmatpush1.msra.mxu0 0.0
    %747 = vmatprep.subr.mxu0 0.0
    %748 = vmatpush1.msra.mxu0 0.0
    %749 = vmatprep.subr.mxu0 0.0
    %750 = vmatpush1.msra.mxu0 0.0
    %751 = vmatprep.subr.mxu0 0.0
    %752 = vmatpush1.msra.mxu0 0.0
    %753 = vmatprep.subr.mxu0 0.0
    %754 = vmatpush1.msra.mxu0 0.0
    %755 = vmatprep.subr.mxu0 0.0
    %756 = vmatpush1.msra.mxu0 0.0
    %757 = vmatprep.subr.mxu0 0.0
    %758 = vmatpush1.msra.mxu0 0.0
    %759 = vmatprep.subr.mxu0 0.0
    %760 = vmatpush1.msra.mxu0 0.0
    %761 = vmatprep.subr.mxu0 0.0
    %762 = vmatpush1.msra.mxu0 0.0
    %763 = vmatprep.subr.mxu0 0.0
    %764 = vmatpush1.msra.mxu0 0.0
    %765 = vmatprep.subr.mxu0 0.0
    %766 = vmatpush1.msra.mxu0 0.0
    %767 = vmatprep.subr.mxu0 0.0
    %768 = vmatpush1.msra.mxu0 0.0
    %769 = vmatprep.subr.mxu0 0.0
    %770 = vmatpush1.msra.mxu0 0.0
    %771 = vmatprep.subr.mxu0 0.0
    %772 = vmatpush1.msra.mxu0 0.0
    %773 = vmatprep.subr.mxu0 0.0
    %774 = vmatpush1.msra.mxu0 0.0
    %775 = vmatprep.subr.mxu0 0.0
    %776 = vmatpush1.msra.mxu0 0.0
    %777 = vmatprep.subr.mxu0 0.0
    %778 = vmatpush1.msra.mxu0 0.0
    %779 = vmatprep.subr.mxu0 0.0
    %780 = vmatpush1.msra.mxu0 0.0
    %781 = vmatprep.subr.mxu0 0.0
    %782 = vmatpush1.msra.mxu0 0.0
    %783 = vmatprep.subr.mxu0 0.0
    %784 = vmatpush1.msra.mxu0 0.0
    %785 = vmatprep.subr.mxu0 0.0
    %786 = vmatpush1.msra.mxu0 0.0
    %787 = vmatprep.subr.mxu0 0.0
    %788 = vmatpush1.msra.mxu0 0.0
    %789 = vmatprep.subr.mxu0 0.0
    %790 = vmatpush1.msra.mxu0 0.0
    %791 = vmatprep.subr.mxu0 0.0
    %792 = vmatpush1.msra.mxu0 0.0
    %793 = vmatprep.mubr.f32.mxu0 0.0
    %794 = vmatmul.mubr.f32.gmra.mrb[0].mxu0 %v727
    %v795 = vpop.f32.mrb[0].mxu0
    %v796 = vadd.f32 %v724, %v795
    %v797 = vpop.f32.mrb[0].mxu0
    %798 = vdwg.mxu0
    %v799 = vsub.f32 1.0, %v718
    %v800 = vmul.f32 %v718, %v799
    %v801 = vsel %vm144, %v800, 0.0
    %v802 = vrot.slane %v801, 4
    %v803 = vadd.f32 %v801, %v802
    %v804 = vrot.slane %v803, 2
    %v805 = vadd.f32 %v803, %v804
    %v806 = vrot.slane %v805, 1
    %v807 = vadd.f32 %v805, %v806
    %v808 = vmul.f32 %v807, %v227
    %v809 = vmul.f32 %v628, %v808
    %v811 = vsel %vm144, %v809, 0
    %813 = vmatprep.subr.mxu0 0.0
    %814 = vmatpush1.msra.mxu0 %v629
    %815 = vmatprep.subr.mxu0 0.0
    %816 = vmatpush1.msra.mxu0 %v630
    %817 = vmatprep.subr.mxu0 0.0
    %818 = vmatpush1.msra.mxu0 %v631
    %819 = vmatprep.subr.mxu0 0.0
    %820 = vmatpush1.msra.mxu0 %v632
    %821 = vmatprep.subr.mxu0 0.0
    %822 = vmatpush1.msra.mxu0 0.0
    %823 = vmatprep.subr.mxu0 0.0
    %824 = vmatpush1.msra.mxu0 0.0
    %825 = vmatprep.subr.mxu0 0.0
    %826 = vmatpush1.msra.mxu0 0.0
    %827 = vmatprep.subr.mxu0 0.0
    %828 = vmatpush1.msra.mxu0 0.0
    %829 = vmatprep.subr.mxu0 0.0
    %830 = vmatpush1.msra.mxu0 0.0
    %831 = vmatprep.subr.mxu0 0.0
    %832 = vmatpush1.msra.mxu0 0.0
    %833 = vmatprep.subr.mxu0 0.0
    %834 = vmatpush1.msra.mxu0 0.0
    %835 = vmatprep.subr.mxu0 0.0
    %836 = vmatpush1.msra.mxu0 0.0
    %837 = vmatprep.subr.mxu0 0.0
    %838 = vmatpush1.msra.mxu0 0.0
    %839 = vmatprep.subr.mxu0 0.0
    %840 = vmatpush1.msra.mxu0 0.0
    %841 = vmatprep.subr.mxu0 0.0
    %842 = vmatpush1.msra.mxu0 0.0
    %843 = vmatprep.subr.mxu0 0.0
    %844 = vmatpush1.msra.mxu0 0.0
    %845 = vmatprep.subr.mxu0 0.0
    %846 = vmatpush1.msra.mxu0 0.0
    %847 = vmatprep.subr.mxu0 0.0
    %848 = vmatpush1.msra.mxu0 0.0
    %849 = vmatprep.subr.mxu0 0.0
    %850 = vmatpush1.msra.mxu0 0.0
    %851 = vmatprep.subr.mxu0 0.0
    %852 = vmatpush1.msra.mxu0 0.0
    %853 = vmatprep.subr.mxu0 0.0
    %854 = vmatpush1.msra.mxu0 0.0
    %855 = vmatprep.subr.mxu0 0.0
    %856 = vmatpush1.msra.mxu0 0.0
    %857 = vmatprep.subr.mxu0 0.0
    %858 = vmatpush1.msra.mxu0 0.0
    %859 = vmatprep.subr.mxu0 0.0
    %860 = vmatpush1.msra.mxu0 0.0
    %861 = vmatprep.subr.mxu0 0.0
    %862 = vmatpush1.msra.mxu0 0.0
    %863 = vmatprep.subr.mxu0 0.0
    %864 = vmatpush1.msra.mxu0 0.0
    %865 = vmatprep.subr.mxu0 0.0
    %866 = vmatpush1.msra.mxu0 0.0
    %867 = vmatprep.subr.mxu0 0.0
    %868 = vmatpush1.msra.mxu0 0.0
    %869 = vmatprep.subr.mxu0 0.0
    %870 = vmatpush1.msra.mxu0 0.0
    %871 = vmatprep.subr.mxu0 0.0
    %872 = vmatpush1.msra.mxu0 0.0
    %873 = vmatprep.subr.mxu0 0.0
    %874 = vmatpush1.msra.mxu0 0.0
    %875 = vmatprep.subr.mxu0 0.0
    %876 = vmatpush1.msra.mxu0 0.0
    %877 = vmatprep.mubr.f32.mxu0 0.0
    %878 = vmatmul.mubr.f32.gmra.mrb[0].mxu0 %v811
    %v879 = vpop.f32.mrb[0].mxu0
    %v880 = vadd.f32 0.0, %v879
    %v881 = vpop.f32.mrb[0].mxu0
    %882 = vdwg.mxu0
    %v884 = vsel %vm400, %v627, 0
    %v887 = vsel %vm404, %v880, 0
    %889 = vmatprep.subr.mxu0 0.0
    %890 = vmatpush1.msra.mxu0 %v887
    %891 = vmatprep.subr.mxu0 0.0
    %892 = vmatpush1.msra.mxu0 0.0
    %893 = vmatprep.subr.mxu0 0.0
    %894 = vmatpush1.msra.mxu0 0.0
    %895 = vmatprep.subr.mxu0 0.0
    %896 = vmatpush1.msra.mxu0 0.0
    %897 = vmatprep.subr.mxu0 0.0
    %898 = vmatpush1.msra.mxu0 0.0
    %899 = vmatprep.subr.mxu0 0.0
    %900 = vmatpush1.msra.mxu0 0.0
    %901 = vmatprep.subr.mxu0 0.0
    %902 = vmatpush1.msra.mxu0 0.0
    %903 = vmatprep.subr.mxu0 0.0
    %904 = vmatpush1.msra.mxu0 0.0
    %905 = vmatprep.subr.mxu0 0.0
    %906 = vmatpush1.msra.mxu0 0.0
    %907 = vmatprep.subr.mxu0 0.0
    %908 = vmatpush1.msra.mxu0 0.0
    %909 = vmatprep.subr.mxu0 0.0
    %910 = vmatpush1.msra.mxu0 0.0
    %911 = vmatprep.subr.mxu0 0.0
    %912 = vmatpush1.msra.mxu0 0.0
    %913 = vmatprep.subr.mxu0 0.0
    %914 = vmatpush1.msra.mxu0 0.0
    %915 = vmatprep.subr.mxu0 0.0
    %916 = vmatpush1.msra.mxu0 0.0
    %917 = vmatprep.subr.mxu0 0.0
    %918 = vmatpush1.msra.mxu0 0.0
    %919 = vmatprep.subr.mxu0 0.0
    %920 = vmatpush1.msra.mxu0 0.0
    %921 = vmatprep.subr.mxu0 0.0
    %922 = vmatpush1.msra.mxu0 0.0
    %923 = vmatprep.subr.mxu0 0.0
    %924 = vmatpush1.msra.mxu0 0.0
    %925 = vmatprep.subr.mxu0 0.0
    %926 = vmatpush1.msra.mxu0 0.0
    %927 = vmatprep.subr.mxu0 0.0
    %928 = vmatpush1.msra.mxu0 0.0
    %929 = vmatprep.subr.mxu0 0.0
    %930 = vmatpush1.msra.mxu0 0.0
    %931 = vmatprep.subr.mxu0 0.0
    %932 = vmatpush1.msra.mxu0 0.0
    %933 = vmatprep.subr.mxu0 0.0
    %934 = vmatpush1.msra.mxu0 0.0
    %935 = vmatprep.subr.mxu0 0.0
    %936 = vmatpush1.msra.mxu0 0.0
    %937 = vmatprep.subr.mxu0 0.0
    %938 = vmatpush1.msra.mxu0 0.0
    %939 = vmatprep.subr.mxu0 0.0
    %940 = vmatpush1.msra.mxu0 0.0
    %941 = vmatprep.subr.mxu0 0.0
    %942 = vmatpush1.msra.mxu0 0.0
    %943 = vmatprep.subr.mxu0 0.0
    %944 = vmatpush1.msra.mxu0 0.0
    %945 = vmatprep.subr.mxu0 0.0
    %946 = vmatpush1.msra.mxu0 0.0
    %947 = vmatprep.subr.mxu0 0.0
    %948 = vmatpush1.msra.mxu0 0.0
    %949 = vmatprep.subr.mxu0 0.0
    %950 = vmatpush1.msra.mxu0 0.0
    %951 = vmatprep.subr.mxu0 0.0
    %952 = vmatpush1.msra.mxu0 0.0
    %953 = vmatprep.mubr.f32.mxu0 0.0
    %954 = vmatmul.mubr.f32.gmra.mrb[0].mxu0 %v884
    %v955 = vpop.f32.mrb[0].mxu0
    %v956 = vadd.f32 0.0, %v955
    %v957 = vpop.f32.mrb[0].mxu0
    %958 = vdwg.mxu0
    %959 = vst.msk [vmem:[#allocation3] sm:$0xff] %vm400, %v215
    %961 = vrot.lane.b32.xlu0 %v382, 4
    %v962 = vpop.permute.xlu0 %961
    %vm964 = vcmask 64544
    %965 = vst.msk [vmem:[#allocation3] sm:$0xff] %vm964, %v962
    %966 = vrot.lane.b32.xlu0 %v627, 8
    %v967 = vpop.permute.xlu0 %966
    %vm969 = vcmask 97344
    %970 = vst.msk [vmem:[#allocation3] sm:$0xff] %vm969, %v967
    %972 = vrot.lane.b32.xlu0 %v796, 12
    %v973 = vpop.permute.xlu0 %972
    %vm975 = vcmask 228448
    %976 = vst.msk [vmem:[#allocation3] sm:$0xff] %vm975, %v973
    %978 = vrot.lane.b32.xlu0 %v956, 28
    %v979 = vpop.permute.xlu0 %978
    %vm981 = vcmask 359648
    %982 = vst.msk [vmem:[#allocation3] sm:$0xff] %vm981, %v979
    // Predicated region
    $region50: #{tpu_custom_call.1} parent=1 // pred_check
      _
    $region51: #{tpu_custom_call.1} parent=1 // pred_check_branch
      %984 = sbr.rel (0) target = $region53
    $region52: #{tpu_custom_call.1} parent=1 // pred_region
      %s986 = ssub.s32 128, 128
      %987 = vsyncadd [#allocation4], %s986
      %s989 = sshll.u32 [#allocation3], 4
      %s990 = int_to_ptr.vmem [resolvable:$true] %s989
      %992 = dma.vmem_to_hbm [thread:$0]  %s990, 128, %s12, [#allocation4]
    $region53: #{tpu_custom_call.1} parent=1 // pred_fallthru
      _
    // Predicated region
    $region54: #{tpu_custom_call.1} parent=1 // pred_check
      _
    $region55: #{tpu_custom_call.1} parent=1 // pred_check_branch
      %994 = sbr.rel (0) target = $region57
    $region56: #{tpu_custom_call.1} parent=1 // pred_region
      %995 = dma.done [#allocation4], 128
    $region57: #{tpu_custom_call.1} parent=1 // pred_fallthru
      _
    %996 = vsyncpa [#allocation4], 1

</llo_original>
